<compile_context>
chip_gen: v5e
topology: v5e:2x2
jax: 0.10.0
libtpu: 0.0.40
codegen_flags: <defaults>
</compile_context>

<pallas_src>
import jax
import jax.numpy as jnp
import numpy as np
from jax.experimental import pallas as pl
from jax.experimental.pallas import tpu as pltpu


def gmodel01_kernel(mp_idx_ref,                      # scalar prefetch (SMEM); used by index_maps
                    walks_ref,                       # [TB, 9] int32 : [n1(3) | n2(3) | e(3)]
                    fc1_wT_ref, fc1_b_ref, w_edge_ref,
                    wmp_wT_ref, wmp_b_ref,           # metapath-selected slices [E,E], [1,E]
                    agg0_ref, agg1_ref):             # [TB, 3], [TB, E]
    del mp_idx_ref                                   # metapath selection is done in index_maps
    TB = walks_ref.shape[0]
    N, E = fc1_wT_ref.shape                          # num_nodes, embedding_size
    NE = w_edge_ref.shape[0]                         # num_edge_type
    wdt = fc1_wT_ref.dtype                           # bf16 weight tables, f32 accumulation

    w = walks_ref[...]                               # [TB, 9] int32

    # --- fc1(identity_embedding(idx)) == one_hot(idx) @ fc1_w.T + b.
    #     All 6 node lookups stacked into ONE MXU matmul.
    #     NOTE: out-of-range indices yield an all-zero one-hot row (result = fc1_b),
    #     unlike nn.Embedding which would raise.
    idx_all = jnp.concatenate([w[:, t:t + 1] for t in range(6)], axis=0)      # [6*TB, 1]
    node_iota = jax.lax.broadcasted_iota(jnp.int32, (6 * TB, N), 1)
    onehot = (node_iota == idx_all).astype(jnp.float32).astype(wdt)           # exact in bf16
    fc1_out = jnp.dot(onehot, fc1_wT_ref[...],
                      preferred_element_type=jnp.float32)                     # [6*TB, E] f32
    fc1_out = fc1_out + fc1_b_ref[...]                                        # bias (n1 & n2)

    # --- W_edge lookup: NE is tiny -> VPU select/sum (frees the MXU slot).
    w_edge = w_edge_ref[...].astype(jnp.float32)                              # [NE, E]
    if NE <= 8:
        def edge_lookup(e_col):                                               # e_col: [TB,1] i32
            acc = jnp.zeros((TB, E), jnp.float32)
            for j in range(NE):
                sel = (e_col == j).astype(jnp.float32)                        # [TB, 1]
                acc = acc + sel * w_edge[j:j + 1, :]                          # [TB, E]
            return acc
    else:                                                                     # fallback: one-hot matmul
        def edge_lookup(e_col):
            eio = jax.lax.broadcasted_iota(jnp.int32, (TB, NE), 1)
            oh = (eio == e_col).astype(jnp.float32)
            return jnp.dot(oh, w_edge, preferred_element_type=jnp.float32)

    # --- per walk-step products, lane-mean (mp_agg_0) and triplet-mean pooling.
    means = []
    pooled = jnp.zeros((TB, E), jnp.float32)
    for t in range(3):
        n1_vec = fc1_out[t * TB:(t + 1) * TB, :]                              # [TB, E]
        n2_vec = fc1_out[(3 + t) * TB:(4 + t) * TB, :]                        # [TB, E]
        edge_vec = edge_lookup(w[:, 6 + t:7 + t])                             # [TB, E]
        n1n2e = n1_vec * n2_vec * edge_vec                                    # f32 (v5e-friendly)
        means.append(jnp.mean(n1n2e, axis=-1, keepdims=True))                 # [TB, 1]
        pooled = pooled + n1n2e
    agg0_ref[...] = jnp.concatenate(means, axis=1)                            # [TB, 3] lane-dense

    # mp_agg_1 = Linear_{mp_type_idx}(mean over the 3 walk steps).
    # (The original feeds [B,3] into Linear(E,E) — a shape bug; the triplet-mean
    #  pooling keeps the indexed Linear well formed, same convention as v1.)
    agg = (pooled * jnp.float32(1.0 / 3.0)).astype(wmp_wT_ref.dtype)
    agg1_ref[...] = (jnp.dot(agg, wmp_wT_ref[...], preferred_element_type=jnp.float32)
                     + wmp_b_ref[...])

    # TODO(synk): self.MP_attention(query, key, value) — query/key/value are undefined
    # (NameError) in the original forward, so there is nothing faithful to implement.


def prepare_params(params):
    """One-time layout/dtype prep (NOT per forward call): pre-transpose the Linear
    weights and store MXU-side tables in bfloat16."""
    num_mp, E, _ = params["wmp_w"].shape
    return {
        "fc1_wT": params["fc1_w"].T.astype(jnp.bfloat16),                      # [N, E]
        "fc1_b": params["fc1_b"].reshape(1, E).astype(jnp.float32),            # [1, E]
        "w_edge": params["w_edge"].astype(jnp.float32),                        # [NE, E] (VPU path)
        "wmp_wT": jnp.transpose(params["wmp_w"], (0, 2, 1)).astype(jnp.bfloat16),  # [num_mp, E, E]
        "wmp_b": params["wmp_b"].reshape(num_mp, 1, E).astype(jnp.float32),    # [num_mp, 1, E]
    }


def gmodel01_forward(prepared, node_idx, mp_type_idx, node_mp_walks, *, row_tile=None):
    del node_idx                       # unused by the original forward; kept for signature parity
    B, Wd = node_mp_walks.shape
    assert Wd == 9, "node_mp_walks last dim must split into 3 chunks of 3 (n1, n2, e)"
    N, E = prepared["fc1_wT"].shape
    NE, _ = prepared["w_edge"].shape

    walks = node_mp_walks.astype(jnp.int32)                                    # [B, 9]

    # Batch-row tiling: big tiles amortize per-step overhead; "parallel" lets the
    # two v7x TensorCores split the row blocks.
    TB = row_tile if row_tile is not None else min(B, 256)
    assert B % TB == 0 and (TB % 8 == 0 or TB == B), "row tile must divide B (and be 8-aligned)"
    grid = (B // TB,)

    itm_fc1 = prepared["fc1_wT"].dtype.itemsize
    itm_wmp = prepared["wmp_wT"].dtype.itemsize
    flops = 2 * 6 * B * N * E + 2 * B * E * E + 12 * B * E
    bytes_accessed = (B * 9 * 4 + N * E * itm_fc1 + NE * E * 4 + E * E * itm_wmp
                      + E * 4 + B * 3 * 4 + B * E * 4)

    grid_spec = pltpu.PrefetchScalarGridSpec(
        num_scalar_prefetch=1,
        grid=grid,
        in_specs=[
            pl.BlockSpec((TB, 9), lambda i, mp: (i, 0)),                       # fused index slab
            pl.BlockSpec(memory_space=pltpu.MemorySpace.VMEM),                 # fc1_wT: resident, single copy
            pl.BlockSpec(memory_space=pltpu.MemorySpace.VMEM),                 # fc1_b
            pl.BlockSpec(memory_space=pltpu.MemorySpace.VMEM),                 # w_edge
            pl.BlockSpec((None, E, E), lambda i, mp: (mp[0], 0, 0)),           # selected metapath W
            pl.BlockSpec((None, 1, E), lambda i, mp: (mp[0], 0, 0)),           # selected metapath b
        ],
        out_specs=(
            pl.BlockSpec((TB, 3), lambda i, mp: (i, 0)),                       # mp_agg_0, lane-dense
            pl.BlockSpec((TB, E), lambda i, mp: (i, 0)),                       # mp_agg_1
        ),
    )

    agg0, agg1 = pl.pallas_call(
        gmodel01_kernel,
        grid_spec=grid_spec,
        out_shape=(
            jax.ShapeDtypeStruct((B, 3), jnp.float32),
            jax.ShapeDtypeStruct((B, E), jnp.float32),
        ),
        compiler_params=pltpu.CompilerParams(dimension_semantics=("parallel",)),
        cost_estimate=pl.CostEstimate(flops=flops, transcendentals=0,
                                      bytes_accessed=bytes_accessed),
    )(jnp.asarray([mp_type_idx], dtype=jnp.int32),
      walks, prepared["fc1_wT"], prepared["fc1_b"], prepared["w_edge"],
      prepared["wmp_wT"], prepared["wmp_b"])

    # NOTE: the original forward has no `return` (returns None); we return the two
    # intermediate aggregates so the kernel result can be inspected / blocked on.
    return agg0, agg1


def gmodel01_reference(prepared, mp_type_idx, node_mp_walks):
    """Pure-JAX reference mirroring the kernel numerics (bf16 tables, f32 accumulate)."""
    fc1_wT = prepared["fc1_wT"].astype(jnp.float32)                            # [N, E]
    fc1_b = prepared["fc1_b"]
    w_edge = prepared["w_edge"]
    wmp_wT = prepared["wmp_wT"][mp_type_idx]                                   # [E, E] bf16
    wmp_b = prepared["wmp_b"][mp_type_idx]                                     # [1, E]

    n1 = node_mp_walks[:, 0:3]
    n2 = node_mp_walks[:, 3:6]
    e = node_mp_walks[:, 6:9]
    n1_vec = fc1_wT[n1] + fc1_b                                                # [B, 3, E]
    n2_vec = fc1_wT[n2] + fc1_b
    edge_vec = w_edge[e]
    n1n2e = n1_vec * n2_vec * edge_vec
    mp_agg_0 = jnp.mean(n1n2e, axis=-1)                                        # [B, 3]
    agg = (jnp.sum(n1n2e, axis=1) * jnp.float32(1.0 / 3.0)).astype(jnp.bfloat16)
    mp_agg_1 = jnp.dot(agg, wmp_wT, preferred_element_type=jnp.float32) + wmp_b
    return mp_agg_0, mp_agg_1


if __name__ == "__main__":
    # Small, forward-consistent shapes (B chosen so the demo exercises grid=(2,)).
    num_nodes = 16
    embedding_size = 32
    num_edge_type = 4
    num_metapaths = 3
    B = 16

    key = jax.random.PRNGKey(0)
    k_fc1w, k_fc1b, k_edge, k_mpw, k_mpb, k_nodes, k_edges = jax.random.split(key, 7)

    params = {
        "fc1_w": 0.1 * jax.random.normal(k_fc1w, (embedding_size, num_nodes), jnp.float32),
        "fc1_b": 0.1 * jax.random.normal(k_fc1b, (embedding_size,), jnp.float32),
        "w_edge": 0.1 * jax.random.normal(k_edge, (num_edge_type, embedding_size), jnp.float32),
        "wmp_w": 0.1 * jax.random.normal(
            k_mpw, (num_metapaths, embedding_size, embedding_size), jnp.float32),
        "wmp_b": 0.1 * jax.random.normal(k_mpb, (num_metapaths, embedding_size), jnp.float32),
    }
    prepared = prepare_params(params)   # one-time transpose + dtype prep

    # node_mp_walks: [B, 9] = [n1(3) | n2(3) | edge_type(3)]
    node_mp_walks = jnp.concatenate(
        [
            jax.random.randint(k_nodes, (B, 6), 0, num_nodes),
            jax.random.randint(k_edges, (B, 3), 0, num_edge_type),
        ],
        axis=-1,
    ).astype(jnp.int32)
    node_idx = jnp.arange(B, dtype=jnp.int32)
    mp_type_idx = 1

    mp_agg_0, mp_agg_1 = gmodel01_forward(
        prepared, node_idx, mp_type_idx, node_mp_walks, row_tile=8)            # grid=(2,)
    jax.block_until_ready((mp_agg_0, mp_agg_1))

    ref0, ref1 = gmodel01_reference(prepared, mp_type_idx, node_mp_walks)
    np.testing.assert_allclose(np.asarray(mp_agg_0), np.asarray(ref0), rtol=1e-3, atol=1e-5)
    np.testing.assert_allclose(np.asarray(mp_agg_1), np.asarray(ref1), rtol=1e-3, atol=1e-5)

    assert mp_agg_0.shape == (B, 3) and mp_agg_1.shape == (B, embedding_size)
    print("KERNEL_OK")
</pallas_src>

<mosaic_0001>
module attributes {stable_mosaic.version = 11 : i64} {
  func.func @gmodel01_kernel(%arg0: i32, %arg1: memref<1xi32, #tpu.memory_space<smem>>, %arg2: memref<8x9xi32, #tpu.memory_space<vmem>>, %arg3: memref<16x32xbf16, #tpu.memory_space<vmem>>, %arg4: memref<1x32xf32, #tpu.memory_space<vmem>>, %arg5: memref<4x32xf32, #tpu.memory_space<vmem>>, %arg6: memref<1x32x32xbf16, #tpu.memory_space<vmem>>, %arg7: memref<1x1x32xf32, #tpu.memory_space<vmem>>, %arg8: memref<8x3xf32, #tpu.memory_space<vmem>>, %arg9: memref<8x32xf32, #tpu.memory_space<vmem>>) attributes {dimension_semantics = [#tpu.dimension_semantics<parallel>], iteration_bounds = array<i64: 2>, scalar_prefetch = 1 : i64, scratch_operands = 0 : i64, tpu.core_type = #tpu.core_type<tc>, window_params = [{transform_indices = @transform_0, window_bounds = array<i64: 8, 9>}, {pipeline_mode = #tpu.pipeline_mode<synchronous>, transform_indices = @transform_1, window_bounds = array<i64: 16, 32>}, {pipeline_mode = #tpu.pipeline_mode<synchronous>, transform_indices = @transform_2, window_bounds = array<i64: 1, 32>}, {pipeline_mode = #tpu.pipeline_mode<synchronous>, transform_indices = @transform_3, window_bounds = array<i64: 4, 32>}, {transform_indices = @transform_4, window_bounds = array<i64: 1, 32, 32>}, {transform_indices = @transform_5, window_bounds = array<i64: 1, 1, 32>}, {transform_indices = @transform_6, window_bounds = array<i64: 8, 3>}, {transform_indices = @transform_7, window_bounds = array<i64: 8, 32>}]} {
    %c0 = arith.constant 0 : index
    %c0_0 = arith.constant 0 : index
    %0 = vector.load %arg2[%c0, %c0_0] : memref<8x9xi32, #tpu.memory_space<vmem>>, vector<8x9xi32>
    %1 = vector.extract_strided_slice %0 {offsets = [0, 0], sizes = [8, 1], strides = [1, 1]} : vector<8x9xi32> to vector<8x1xi32>
    %2 = vector.extract_strided_slice %0 {offsets = [0, 1], sizes = [8, 1], strides = [1, 1]} : vector<8x9xi32> to vector<8x1xi32>
    %3 = vector.extract_strided_slice %0 {offsets = [0, 2], sizes = [8, 1], strides = [1, 1]} : vector<8x9xi32> to vector<8x1xi32>
    %4 = vector.extract_strided_slice %0 {offsets = [0, 3], sizes = [8, 1], strides = [1, 1]} : vector<8x9xi32> to vector<8x1xi32>
    %5 = vector.extract_strided_slice %0 {offsets = [0, 4], sizes = [8, 1], strides = [1, 1]} : vector<8x9xi32> to vector<8x1xi32>
    %6 = vector.extract_strided_slice %0 {offsets = [0, 5], sizes = [8, 1], strides = [1, 1]} : vector<8x9xi32> to vector<8x1xi32>
    %7 = tpu.concatenate %1, %2, %3, %4, %5, %6 in 0 : vector<8x1xi32>, vector<8x1xi32>, vector<8x1xi32>, vector<8x1xi32>, vector<8x1xi32>, vector<8x1xi32> -> vector<48x1xi32>
    %8 = tpu.iota {dimensions = array<i32: 1>} : vector<48x16xi32>
    %9 = vector.broadcast %7 : vector<48x1xi32> to vector<48x16xi32>
    %10 = arith.cmpi eq, %8, %9 : vector<48x16xi32>
    %11 = arith.extui %10 : vector<48x16xi1> to vector<48x16xi32>
    %12 = arith.sitofp %11 : vector<48x16xi32> to vector<48x16xf32>
    %13 = arith.truncf %12 : vector<48x16xf32> to vector<48x16xbf16>
    %c0_1 = arith.constant 0 : index
    %c0_2 = arith.constant 0 : index
    %14 = vector.load %arg3[%c0_1, %c0_2] : memref<16x32xbf16, #tpu.memory_space<vmem>>, vector<16x32xbf16>
    %cst = arith.constant dense<0.000000e+00> : vector<48x32xf32>
    %15 = tpu.matmul %13, %14, %cst {dimension_numbers = #tpu.dot_dimension_numbers<[1], [0], [0], [1], [0, 0, 1, 1], [], []>} : vector<48x16xbf16>, vector<16x32xbf16>, vector<48x32xf32> -> vector<48x32xf32>
    %c0_3 = arith.constant 0 : index
    %c0_4 = arith.constant 0 : index
    %16 = vector.load %arg4[%c0_3, %c0_4] : memref<1x32xf32, #tpu.memory_space<vmem>>, vector<1x32xf32>
    %17 = vector.broadcast %16 : vector<1x32xf32> to vector<48x32xf32>
    %18 = arith.addf %15, %17 : vector<48x32xf32>
    %c0_5 = arith.constant 0 : index
    %c0_6 = arith.constant 0 : index
    %19 = vector.load %arg5[%c0_5, %c0_6] : memref<4x32xf32, #tpu.memory_space<vmem>>, vector<4x32xf32>
    %cst_7 = arith.constant 0.000000e+00 : f32
    %20 = vector.broadcast %cst_7 : f32 to vector<8x32xf32>
    %21 = vector.extract_strided_slice %18 {offsets = [0, 0], sizes = [8, 32], strides = [1, 1]} : vector<48x32xf32> to vector<8x32xf32>
    %22 = vector.extract_strided_slice %18 {offsets = [24, 0], sizes = [8, 32], strides = [1, 1]} : vector<48x32xf32> to vector<8x32xf32>
    %23 = vector.extract_strided_slice %0 {offsets = [0, 6], sizes = [8, 1], strides = [1, 1]} : vector<8x9xi32> to vector<8x1xi32>
    %cst_8 = arith.constant 0.000000e+00 : f32
    %24 = vector.broadcast %cst_8 : f32 to vector<8x32xf32>
    %c0_i32 = arith.constant 0 : i32
    %25 = vector.broadcast %c0_i32 : i32 to vector<8x1xi32>
    %26 = arith.cmpi eq, %23, %25 : vector<8x1xi32>
    %27 = arith.extui %26 : vector<8x1xi1> to vector<8x1xi32>
    %28 = arith.sitofp %27 : vector<8x1xi32> to vector<8x1xf32>
    %29 = vector.extract_strided_slice %19 {offsets = [0, 0], sizes = [1, 32], strides = [1, 1]} : vector<4x32xf32> to vector<1x32xf32>
    %30 = vector.broadcast %28 : vector<8x1xf32> to vector<8x32xf32>
    %31 = vector.broadcast %29 : vector<1x32xf32> to vector<8x32xf32>
    %32 = arith.mulf %30, %31 : vector<8x32xf32>
    %33 = arith.addf %24, %32 : vector<8x32xf32>
    %c1_i32 = arith.constant 1 : i32
    %34 = vector.broadcast %c1_i32 : i32 to vector<8x1xi32>
    %35 = arith.cmpi eq, %23, %34 : vector<8x1xi32>
    %36 = arith.extui %35 : vector<8x1xi1> to vector<8x1xi32>
    %37 = arith.sitofp %36 : vector<8x1xi32> to vector<8x1xf32>
    %38 = vector.extract_strided_slice %19 {offsets = [1, 0], sizes = [1, 32], strides = [1, 1]} : vector<4x32xf32> to vector<1x32xf32>
    %39 = vector.broadcast %37 : vector<8x1xf32> to vector<8x32xf32>
    %40 = vector.broadcast %38 : vector<1x32xf32> to vector<8x32xf32>
    %41 = arith.mulf %39, %40 : vector<8x32xf32>
    %42 = arith.addf %33, %41 : vector<8x32xf32>
    %c2_i32 = arith.constant 2 : i32
    %43 = vector.broadcast %c2_i32 : i32 to vector<8x1xi32>
    %44 = arith.cmpi eq, %23, %43 : vector<8x1xi32>
    %45 = arith.extui %44 : vector<8x1xi1> to vector<8x1xi32>
    %46 = arith.sitofp %45 : vector<8x1xi32> to vector<8x1xf32>
    %47 = vector.extract_strided_slice %19 {offsets = [2, 0], sizes = [1, 32], strides = [1, 1]} : vector<4x32xf32> to vector<1x32xf32>
    %48 = vector.broadcast %46 : vector<8x1xf32> to vector<8x32xf32>
    %49 = vector.broadcast %47 : vector<1x32xf32> to vector<8x32xf32>
    %50 = arith.mulf %48, %49 : vector<8x32xf32>
    %51 = arith.addf %42, %50 : vector<8x32xf32>
    %c3_i32 = arith.constant 3 : i32
    %52 = vector.broadcast %c3_i32 : i32 to vector<8x1xi32>
    %53 = arith.cmpi eq, %23, %52 : vector<8x1xi32>
    %54 = arith.extui %53 : vector<8x1xi1> to vector<8x1xi32>
    %55 = arith.sitofp %54 : vector<8x1xi32> to vector<8x1xf32>
    %56 = vector.extract_strided_slice %19 {offsets = [3, 0], sizes = [1, 32], strides = [1, 1]} : vector<4x32xf32> to vector<1x32xf32>
    %57 = vector.broadcast %55 : vector<8x1xf32> to vector<8x32xf32>
    %58 = vector.broadcast %56 : vector<1x32xf32> to vector<8x32xf32>
    %59 = arith.mulf %57, %58 : vector<8x32xf32>
    %60 = arith.addf %51, %59 : vector<8x32xf32>
    %61 = arith.mulf %21, %22 : vector<8x32xf32>
    %62 = arith.mulf %61, %60 : vector<8x32xf32>
    %cst_9 = arith.constant dense<0.000000e+00> : vector<8xf32>
    %63 = vector.multi_reduction <add>, %62, %cst_9 [1] : vector<8x32xf32> to vector<8xf32>
    %64 = vector.shape_cast %63 : vector<8xf32> to vector<8x1xf32>
    %cst_10 = arith.constant 3.200000e+01 : f32
    %65 = vector.broadcast %cst_10 : f32 to vector<8x1xf32>
    %66 = arith.divf %64, %65 : vector<8x1xf32>
    %67 = arith.addf %20, %62 : vector<8x32xf32>
    %68 = vector.extract_strided_slice %18 {offsets = [8, 0], sizes = [8, 32], strides = [1, 1]} : vector<48x32xf32> to vector<8x32xf32>
    %69 = vector.extract_strided_slice %18 {offsets = [32, 0], sizes = [8, 32], strides = [1, 1]} : vector<48x32xf32> to vector<8x32xf32>
    %70 = vector.extract_strided_slice %0 {offsets = [0, 7], sizes = [8, 1], strides = [1, 1]} : vector<8x9xi32> to vector<8x1xi32>
    %cst_11 = arith.constant 0.000000e+00 : f32
    %71 = vector.broadcast %cst_11 : f32 to vector<8x32xf32>
    %c0_i32_12 = arith.constant 0 : i32
    %72 = vector.broadcast %c0_i32_12 : i32 to vector<8x1xi32>
    %73 = arith.cmpi eq, %70, %72 : vector<8x1xi32>
    %74 = arith.extui %73 : vector<8x1xi1> to vector<8x1xi32>
    %75 = arith.sitofp %74 : vector<8x1xi32> to vector<8x1xf32>
    %76 = vector.extract_strided_slice %19 {offsets = [0, 0], sizes = [1, 32], strides = [1, 1]} : vector<4x32xf32> to vector<1x32xf32>
    %77 = vector.broadcast %75 : vector<8x1xf32> to vector<8x32xf32>
    %78 = vector.broadcast %76 : vector<1x32xf32> to vector<8x32xf32>
    %79 = arith.mulf %77, %78 : vector<8x32xf32>
    %80 = arith.addf %71, %79 : vector<8x32xf32>
    %c1_i32_13 = arith.constant 1 : i32
    %81 = vector.broadcast %c1_i32_13 : i32 to vector<8x1xi32>
    %82 = arith.cmpi eq, %70, %81 : vector<8x1xi32>
    %83 = arith.extui %82 : vector<8x1xi1> to vector<8x1xi32>
    %84 = arith.sitofp %83 : vector<8x1xi32> to vector<8x1xf32>
    %85 = vector.extract_strided_slice %19 {offsets = [1, 0], sizes = [1, 32], strides = [1, 1]} : vector<4x32xf32> to vector<1x32xf32>
    %86 = vector.broadcast %84 : vector<8x1xf32> to vector<8x32xf32>
    %87 = vector.broadcast %85 : vector<1x32xf32> to vector<8x32xf32>
    %88 = arith.mulf %86, %87 : vector<8x32xf32>
    %89 = arith.addf %80, %88 : vector<8x32xf32>
    %c2_i32_14 = arith.constant 2 : i32
    %90 = vector.broadcast %c2_i32_14 : i32 to vector<8x1xi32>
    %91 = arith.cmpi eq, %70, %90 : vector<8x1xi32>
    %92 = arith.extui %91 : vector<8x1xi1> to vector<8x1xi32>
    %93 = arith.sitofp %92 : vector<8x1xi32> to vector<8x1xf32>
    %94 = vector.extract_strided_slice %19 {offsets = [2, 0], sizes = [1, 32], strides = [1, 1]} : vector<4x32xf32> to vector<1x32xf32>
    %95 = vector.broadcast %93 : vector<8x1xf32> to vector<8x32xf32>
    %96 = vector.broadcast %94 : vector<1x32xf32> to vector<8x32xf32>
    %97 = arith.mulf %95, %96 : vector<8x32xf32>
    %98 = arith.addf %89, %97 : vector<8x32xf32>
    %c3_i32_15 = arith.constant 3 : i32
    %99 = vector.broadcast %c3_i32_15 : i32 to vector<8x1xi32>
    %100 = arith.cmpi eq, %70, %99 : vector<8x1xi32>
    %101 = arith.extui %100 : vector<8x1xi1> to vector<8x1xi32>
    %102 = arith.sitofp %101 : vector<8x1xi32> to vector<8x1xf32>
    %103 = vector.extract_strided_slice %19 {offsets = [3, 0], sizes = [1, 32], strides = [1, 1]} : vector<4x32xf32> to vector<1x32xf32>
    %104 = vector.broadcast %102 : vector<8x1xf32> to vector<8x32xf32>
    %105 = vector.broadcast %103 : vector<1x32xf32> to vector<8x32xf32>
    %106 = arith.mulf %104, %105 : vector<8x32xf32>
    %107 = arith.addf %98, %106 : vector<8x32xf32>
    %108 = arith.mulf %68, %69 : vector<8x32xf32>
    %109 = arith.mulf %108, %107 : vector<8x32xf32>
    %cst_16 = arith.constant dense<0.000000e+00> : vector<8xf32>
    %110 = vector.multi_reduction <add>, %109, %cst_16 [1] : vector<8x32xf32> to vector<8xf32>
    %111 = vector.shape_cast %110 : vector<8xf32> to vector<8x1xf32>
    %cst_17 = arith.constant 3.200000e+01 : f32
    %112 = vector.broadcast %cst_17 : f32 to vector<8x1xf32>
    %113 = arith.divf %111, %112 : vector<8x1xf32>
    %114 = arith.addf %67, %109 : vector<8x32xf32>
    %115 = vector.extract_strided_slice %18 {offsets = [16, 0], sizes = [8, 32], strides = [1, 1]} : vector<48x32xf32> to vector<8x32xf32>
    %116 = vector.extract_strided_slice %18 {offsets = [40, 0], sizes = [8, 32], strides = [1, 1]} : vector<48x32xf32> to vector<8x32xf32>
    %117 = vector.extract_strided_slice %0 {offsets = [0, 8], sizes = [8, 1], strides = [1, 1]} : vector<8x9xi32> to vector<8x1xi32>
    %cst_18 = arith.constant 0.000000e+00 : f32
    %118 = vector.broadcast %cst_18 : f32 to vector<8x32xf32>
    %c0_i32_19 = arith.constant 0 : i32
    %119 = vector.broadcast %c0_i32_19 : i32 to vector<8x1xi32>
    %120 = arith.cmpi eq, %117, %119 : vector<8x1xi32>
    %121 = arith.extui %120 : vector<8x1xi1> to vector<8x1xi32>
    %122 = arith.sitofp %121 : vector<8x1xi32> to vector<8x1xf32>
    %123 = vector.extract_strided_slice %19 {offsets = [0, 0], sizes = [1, 32], strides = [1, 1]} : vector<4x32xf32> to vector<1x32xf32>
    %124 = vector.broadcast %122 : vector<8x1xf32> to vector<8x32xf32>
    %125 = vector.broadcast %123 : vector<1x32xf32> to vector<8x32xf32>
    %126 = arith.mulf %124, %125 : vector<8x32xf32>
    %127 = arith.addf %118, %126 : vector<8x32xf32>
    %c1_i32_20 = arith.constant 1 : i32
    %128 = vector.broadcast %c1_i32_20 : i32 to vector<8x1xi32>
    %129 = arith.cmpi eq, %117, %128 : vector<8x1xi32>
    %130 = arith.extui %129 : vector<8x1xi1> to vector<8x1xi32>
    %131 = arith.sitofp %130 : vector<8x1xi32> to vector<8x1xf32>
    %132 = vector.extract_strided_slice %19 {offsets = [1, 0], sizes = [1, 32], strides = [1, 1]} : vector<4x32xf32> to vector<1x32xf32>
    %133 = vector.broadcast %131 : vector<8x1xf32> to vector<8x32xf32>
    %134 = vector.broadcast %132 : vector<1x32xf32> to vector<8x32xf32>
    %135 = arith.mulf %133, %134 : vector<8x32xf32>
    %136 = arith.addf %127, %135 : vector<8x32xf32>
    %c2_i32_21 = arith.constant 2 : i32
    %137 = vector.broadcast %c2_i32_21 : i32 to vector<8x1xi32>
    %138 = arith.cmpi eq, %117, %137 : vector<8x1xi32>
    %139 = arith.extui %138 : vector<8x1xi1> to vector<8x1xi32>
    %140 = arith.sitofp %139 : vector<8x1xi32> to vector<8x1xf32>
    %141 = vector.extract_strided_slice %19 {offsets = [2, 0], sizes = [1, 32], strides = [1, 1]} : vector<4x32xf32> to vector<1x32xf32>
    %142 = vector.broadcast %140 : vector<8x1xf32> to vector<8x32xf32>
    %143 = vector.broadcast %141 : vector<1x32xf32> to vector<8x32xf32>
    %144 = arith.mulf %142, %143 : vector<8x32xf32>
    %145 = arith.addf %136, %144 : vector<8x32xf32>
    %c3_i32_22 = arith.constant 3 : i32
    %146 = vector.broadcast %c3_i32_22 : i32 to vector<8x1xi32>
    %147 = arith.cmpi eq, %117, %146 : vector<8x1xi32>
    %148 = arith.extui %147 : vector<8x1xi1> to vector<8x1xi32>
    %149 = arith.sitofp %148 : vector<8x1xi32> to vector<8x1xf32>
    %150 = vector.extract_strided_slice %19 {offsets = [3, 0], sizes = [1, 32], strides = [1, 1]} : vector<4x32xf32> to vector<1x32xf32>
    %151 = vector.broadcast %149 : vector<8x1xf32> to vector<8x32xf32>
    %152 = vector.broadcast %150 : vector<1x32xf32> to vector<8x32xf32>
    %153 = arith.mulf %151, %152 : vector<8x32xf32>
    %154 = arith.addf %145, %153 : vector<8x32xf32>
    %155 = arith.mulf %115, %116 : vector<8x32xf32>
    %156 = arith.mulf %155, %154 : vector<8x32xf32>
    %cst_23 = arith.constant dense<0.000000e+00> : vector<8xf32>
    %157 = vector.multi_reduction <add>, %156, %cst_23 [1] : vector<8x32xf32> to vector<8xf32>
    %158 = vector.shape_cast %157 : vector<8xf32> to vector<8x1xf32>
    %cst_24 = arith.constant 3.200000e+01 : f32
    %159 = vector.broadcast %cst_24 : f32 to vector<8x1xf32>
    %160 = arith.divf %158, %159 : vector<8x1xf32>
    %161 = arith.addf %114, %156 : vector<8x32xf32>
    %162 = tpu.concatenate %66, %113, %160 in 1 : vector<8x1xf32>, vector<8x1xf32>, vector<8x1xf32> -> vector<8x3xf32>
    %c0_25 = arith.constant 0 : index
    %c0_26 = arith.constant 0 : index
    %163 = vector.load %arg8[%c0_25, %c0_26] : memref<8x3xf32, #tpu.memory_space<vmem>>, vector<8x3xf32>
    tpu.vector_store %arg8[%c0_25, %c0_26], %162 {strides = array<i32>} : memref<8x3xf32, #tpu.memory_space<vmem>>, vector<8x3xf32>,
    %cst_27 = arith.constant 0.333333343 : f32
    %164 = vector.broadcast %cst_27 : f32 to vector<8x32xf32>
    %165 = arith.mulf %161, %164 : vector<8x32xf32>
    %166 = arith.truncf %165 : vector<8x32xf32> to vector<8x32xbf16>
    %c0_28 = arith.constant 0 : index
    %c0_29 = arith.constant 0 : index
    %c0_30 = arith.constant 0 : index
    %167 = vector.load %arg6[%c0_28, %c0_29, %c0_30] : memref<1x32x32xbf16, #tpu.memory_space<vmem>>, vector<1x32x32xbf16>
    %168 = vector.shape_cast %167 : vector<1x32x32xbf16> to vector<32x32xbf16>
    %cst_31 = arith.constant dense<0.000000e+00> : vector<8x32xf32>
    %169 = tpu.matmul %166, %168, %cst_31 {dimension_numbers = #tpu.dot_dimension_numbers<[1], [0], [0], [1], [0, 0, 1, 1], [], []>} : vector<8x32xbf16>, vector<32x32xbf16>, vector<8x32xf32> -> vector<8x32xf32>
    %c0_32 = arith.constant 0 : index
    %c0_33 = arith.constant 0 : index
    %c0_34 = arith.constant 0 : index
    %170 = vector.load %arg7[%c0_32, %c0_33, %c0_34] : memref<1x1x32xf32, #tpu.memory_space<vmem>>, vector<1x1x32xf32>
    %171 = vector.shape_cast %170 : vector<1x1x32xf32> to vector<1x32xf32>
    %172 = vector.broadcast %171 : vector<1x32xf32> to vector<8x32xf32>
    %173 = arith.addf %169, %172 : vector<8x32xf32>
    %c0_35 = arith.constant 0 : index
    %c0_36 = arith.constant 0 : index
    %174 = vector.load %arg9[%c0_35, %c0_36] : memref<8x32xf32, #tpu.memory_space<vmem>>, vector<8x32xf32>
    tpu.vector_store %arg9[%c0_35, %c0_36], %173 {strides = array<i32>} : memref<8x32xf32, #tpu.memory_space<vmem>>, vector<8x32xf32>,
    return
  }
  func.func @transform_0(%arg0: i32, %arg1: memref<1xi32, #tpu.memory_space<smem>>) -> (i32, i32) {
    %c0_i32 = arith.constant 0 : i32
    %c0_i32_0 = arith.constant 0 : i32
    return %arg0, %c0_i32 : i32, i32
  }
  func.func @transform_1(%arg0: i32, %arg1: memref<1xi32, #tpu.memory_space<smem>>) -> (i32, i32) {
    %c0_i32 = arith.constant 0 : i32
    %c0_i32_0 = arith.constant 0 : i32
    %c0_i32_1 = arith.constant 0 : i32
    return %c0_i32, %c0_i32_0 : i32, i32
  }
  func.func @transform_2(%arg0: i32, %arg1: memref<1xi32, #tpu.memory_space<smem>>) -> (i32, i32) {
    %c0_i32 = arith.constant 0 : i32
    %c0_i32_0 = arith.constant 0 : i32
    %c0_i32_1 = arith.constant 0 : i32
    return %c0_i32, %c0_i32_0 : i32, i32
  }
  func.func @transform_3(%arg0: i32, %arg1: memref<1xi32, #tpu.memory_space<smem>>) -> (i32, i32) {
    %c0_i32 = arith.constant 0 : i32
    %c0_i32_0 = arith.constant 0 : i32
    %c0_i32_1 = arith.constant 0 : i32
    return %c0_i32, %c0_i32_0 : i32, i32
  }
  func.func @transform_4(%arg0: i32, %arg1: memref<1xi32, #tpu.memory_space<smem>>) -> (i32, i32, i32) {
    %c0 = arith.constant 0 : index
    %0 = memref.load %arg1[%c0] : memref<1xi32, #tpu.memory_space<smem>>
    %c0_i32 = arith.constant 0 : i32
    %c0_i32_0 = arith.constant 0 : i32
    %c0_i32_1 = arith.constant 0 : i32
    return %0, %c0_i32, %c0_i32_0 : i32, i32, i32
  }
  func.func @transform_5(%arg0: i32, %arg1: memref<1xi32, #tpu.memory_space<smem>>) -> (i32, i32, i32) {
    %c0 = arith.constant 0 : index
    %0 = memref.load %arg1[%c0] : memref<1xi32, #tpu.memory_space<smem>>
    %c0_i32 = arith.constant 0 : i32
    %c0_i32_0 = arith.constant 0 : i32
    %c0_i32_1 = arith.constant 0 : i32
    return %0, %c0_i32, %c0_i32_0 : i32, i32, i32
  }
  func.func @transform_6(%arg0: i32, %arg1: memref<1xi32, #tpu.memory_space<smem>>) -> (i32, i32) {
    %c0_i32 = arith.constant 0 : i32
    %c0_i32_0 = arith.constant 0 : i32
    return %arg0, %c0_i32 : i32, i32
  }
  func.func @transform_7(%arg0: i32, %arg1: memref<1xi32, #tpu.memory_space<smem>>) -> (i32, i32) {
    %c0_i32 = arith.constant 0 : i32
    %c0_i32_0 = arith.constant 0 : i32
    return %arg0, %c0_i32 : i32, i32
  }
}

</mosaic_0001>

<llo_original>
// kernel: tpu_custom_call.1
$region0: #{tpu_custom_call.1}
  #allocation0 [shape = 'u32[]', space=smem, size = 0x4, offset = 0x4, fixed_abs, tag = 'smem constant byte address 0x4 - core index']
  #allocation1 [shape = 'u32[72,128]{1,0:T(1,128)}', space=vmem, size = 0x9000, scoped, tag = 'internal scratch']
  #allocation2 [shape = 's32[1]{0}', space=sflag, size = 0x4, scoped, tag = 'scoped memory for tpu_custom_call.1']
  #allocation3 [shape = 's32[1]{0:T(128)S(6)}', space=smem, size = 0x200, scoped, tag = 'prefetched SMEM operand 0']
  %s0 = inlined_call_operand.<no memory space> [shape: s32[1], index: 0, kind: input, shape index: {}]
  %s1 = inlined_call_operand.hbm [shape: s32[16,9], index: 1, kind: input, shape index: {}]
  %s2 = inlined_call_operand.hbm [shape: bf16[16,32], index: 2, kind: input, shape index: {}]
  %s3 = inlined_call_operand.hbm [shape: f32[1,32], index: 3, kind: input, shape index: {}]
  %s4 = inlined_call_operand.vmem [shape: f32[4,32], index: 4, kind: input, shape index: {}]
  %s5 = inlined_call_operand.hbm [shape: bf16[3,32,32], index: 5, kind: input, shape index: {}]
  %s6 = inlined_call_operand.hbm [shape: f32[3,1,32], index: 6, kind: input, shape index: {}]
  %s7 = inlined_call_operand.vmem [shape: f32[16,3], index: 7, kind: output, shape index: {0}]
  %s8 = inlined_call_operand.hbm [shape: f32[16,32], index: 8, kind: output, shape index: {1}]
  %9 = xla_tuple %s7, %s8
  %s10 = sld [smem:[#allocation0]]
  $region85: #{tpu_custom_call.1} parent=0
    _
  %s12 = ssub.s32 1, %s10
  %s13 = scalar_select 0, %s12, %s10
  %14 = sst [smem:[#allocation3]] %s0
  $region1: #{tpu_custom_call.1} parent=0
    #allocation4 [shape = 'u8[8192]{0}', space=vmem, size = 0x2000, scoped, tag = 'input window, operand 1']
    #allocation5 [shape = 's32[2]{0}', space=sflag, size = 0x8, scoped, tag = 'scoped memory for tpu_custom_call.1']
    #allocation6 [shape = 's32[2]{0}', space=sflag, size = 0x8, scoped, tag = 'scoped memory for tpu_custom_call.1']
    #allocation7 [shape = 'u8[4096]{0}', space=vmem, size = 0x1000, scoped, tag = 'input window, operand 2, single buffered']
    #allocation8 [shape = 's32[1]{0}', space=sflag, size = 0x4, scoped, tag = 'scoped memory for tpu_custom_call.1']
    #allocation9 [shape = 'u8[512]{0}', space=vmem, size = 0x400, scoped, tag = 'input window, operand 3, single buffered']
    #allocation10 [shape = 'u8[8192]{0}', space=vmem, size = 0x2000, scoped, tag = 'input window, operand 5, single buffered']
    #allocation11 [shape = 's32[1]{0}', space=sflag, size = 0x4, scoped, tag = 'scoped memory for tpu_custom_call.1']
    #allocation12 [shape = 'u8[512]{0}', space=vmem, size = 0x400, scoped, tag = 'input window, operand 6, single buffered']
    #allocation13 [shape = 'u8[8192]{0}', space=vmem, size = 0x2000, scoped, tag = 'output window, operand 1']
    %15 = vsyncpa [#allocation5], 0
    %s16 = scalar_lea.sflag [#allocation5], 1
    %17 = vsyncpa %s16, 0
    %18 = vsyncpa [#allocation8], 0
    %19 = vsyncpa [#allocation11], 0
    %20 = vsyncpa [#allocation6], 0
    %s21 = scalar_lea.sflag [#allocation6], 1
    %22 = vsyncpa %s21, 0
    loop: start=0, step=1, limit=4
    $region2: #{tpu_custom_call.1} parent=1 // loop_pre_header
      _
    $region3: #{tpu_custom_call.1} parent=1 // loop_header
      %s24 = sphi 0, %s28
      %p25 = scmp.ge.s32.totalorder %s24, 4
      %s34 = sphi 0, %s36
      %s37 = sphi 0, %s34
      %s38 = sphi 0, %s37
      %s54 = sphi 0, %s38
      %s58 = sphi 0, %s58
      %s60 = sphi 0, %s58
      %s61 = sphi 0, %s60
      %s75 = sphi 0, %s61
      %s79 = sphi 0, %s79
      %s81 = sphi 0, %s79
      %s82 = sphi 0, %s81
      %s96 = sphi 0, %s82
      %s100 = sphi 0, %s100
      %s102 = sphi 0, %s100
      %s103 = sphi 0, %s102
      %s117 = sphi 0, %s103
      %s125 = sphi 0, %s127
      %s128 = sphi 0, %s125
      %s129 = sphi 0, %s128
      %s145 = sphi 0, %s129
      %s153 = sphi 0, %s155
      %s156 = sphi 0, %s153
      %s157 = sphi 0, %s156
      %s173 = sphi 0, %s157
      %s179 = sphi 0, %s181
      %s182 = sphi 0, %s179
      %s183 = sphi 0, %s182
      %s199 = sphi 0, %s183
      %s205 = sphi 0, %s207
      %s208 = sphi 0, %s205
      %s209 = sphi 0, %s208
      %s225 = sphi 0, %s209
    $region4: #{tpu_custom_call.1} parent=1 // loop_header_branch
      %27 = sbr.rel (%p25) target = $region8
    $region5: #{tpu_custom_call.1} parent=1 // loop_body
      %s29 = ssub.s32 %s24, 1
      %s30 = ssub.s32 %s24, 2
      %s31 = sadd.s32 %s24, 1
      %s32 = ssub.s32 %s24, %s31
      %p33 = scmp.eq.s32.totalorder %s32, 0
      %s35 = sadd.s32 %s34, 1
      %s36 = scalar_select %p33, %s34, %s35
      %p39 = pneg %p33
      %p40 = scmp.eq.s32.totalorder %s24, 1
      %p41 = por %p39, %p40
      %p42 = scmp.ne.s32.totalorder %s34, %s37
      %p43 = scmp.eq.s32.totalorder %s24, 0
      %p44 = por %p42, %p43
      %p45 = scmp.ne.s32.totalorder %s34, %s37
      %p46 = scmp.eq.s32.totalorder %s29, 1
      %p47 = por %p45, %p46
      %p48 = scmp.ne.s32.totalorder %s37, %s38
      %p49 = scmp.eq.s32.totalorder %s29, 0
      %p50 = por %p48, %p49
      %p51 = scmp.ne.s32.totalorder %s37, %s38
      %p52 = scmp.eq.s32.totalorder %s30, 1
      %p53 = por %p51, %p52
      %p55 = scmp.ne.s32.totalorder %s38, %s54
      %p56 = scmp.eq.s32.totalorder %s30, 0
      %p57 = por %p55, %p56
      %s59 = sadd.s32 %s58, 1
      %p62 = scmp.eq.s32.totalorder %s24, 1
      %p63 = scmp.ne.s32.totalorder %s58, %s60
      %p64 = scmp.eq.s32.totalorder %s24, 0
      %p65 = por %p63, %p64
      %p66 = scmp.ne.s32.totalorder %s58, %s60
      %p67 = scmp.eq.s32.totalorder %s29, 1
      %p68 = por %p66, %p67
      %p69 = scmp.ne.s32.totalorder %s60, %s61
      %p70 = scmp.eq.s32.totalorder %s29, 0
      %p71 = por %p69, %p70
      %p72 = scmp.ne.s32.totalorder %s60, %s61
      %p73 = scmp.eq.s32.totalorder %s30, 1
      %p74 = por %p72, %p73
      %p76 = scmp.ne.s32.totalorder %s61, %s75
      %p77 = scmp.eq.s32.totalorder %s30, 0
      %p78 = por %p76, %p77
      %s80 = sadd.s32 %s79, 1
      %p83 = scmp.eq.s32.totalorder %s24, 1
      %p84 = scmp.ne.s32.totalorder %s79, %s81
      %p85 = scmp.eq.s32.totalorder %s24, 0
      %p86 = por %p84, %p85
      %p87 = scmp.ne.s32.totalorder %s79, %s81
      %p88 = scmp.eq.s32.totalorder %s29, 1
      %p89 = por %p87, %p88
      %p90 = scmp.ne.s32.totalorder %s81, %s82
      %p91 = scmp.eq.s32.totalorder %s29, 0
      %p92 = por %p90, %p91
      %p93 = scmp.ne.s32.totalorder %s81, %s82
      %p94 = scmp.eq.s32.totalorder %s30, 1
      %p95 = por %p93, %p94
      %p97 = scmp.ne.s32.totalorder %s82, %s96
      %p98 = scmp.eq.s32.totalorder %s30, 0
      %p99 = por %p97, %p98
      %s101 = sadd.s32 %s100, 1
      %p104 = scmp.eq.s32.totalorder %s24, 1
      %p105 = scmp.ne.s32.totalorder %s100, %s102
      %p106 = scmp.eq.s32.totalorder %s24, 0
      %p107 = por %p105, %p106
      %p108 = scmp.ne.s32.totalorder %s100, %s102
      %p109 = scmp.eq.s32.totalorder %s29, 1
      %p110 = por %p108, %p109
      %p111 = scmp.ne.s32.totalorder %s102, %s103
      %p112 = scmp.eq.s32.totalorder %s29, 0
      %p113 = por %p111, %p112
      %p114 = scmp.ne.s32.totalorder %s102, %s103
      %p115 = scmp.eq.s32.totalorder %s30, 1
      %p116 = por %p114, %p115
      %p118 = scmp.ne.s32.totalorder %s103, %s117
      %p119 = scmp.eq.s32.totalorder %s30, 0
      %p120 = por %p118, %p119
      %s121 = sld [smem:[#allocation3]]
      %s122 = sld [smem:[#allocation3]]
      %s123 = ssub.s32 %s121, %s122
      %p124 = scmp.eq.s32.totalorder %s123, 0
      %s126 = sadd.s32 %s125, 1
      %s127 = scalar_select %p124, %s125, %s126
      %p130 = pneg %p124
      %p131 = scmp.eq.s32.totalorder %s24, 1
      %p132 = por %p130, %p131
      %p133 = scmp.ne.s32.totalorder %s125, %s128
      %p134 = scmp.eq.s32.totalorder %s24, 0
      %p135 = por %p133, %p134
      %p136 = scmp.ne.s32.totalorder %s125, %s128
      %p137 = scmp.eq.s32.totalorder %s29, 1
      %p138 = por %p136, %p137
      %p139 = scmp.ne.s32.totalorder %s128, %s129
      %p140 = scmp.eq.s32.totalorder %s29, 0
      %p141 = por %p139, %p140
      %p142 = scmp.ne.s32.totalorder %s128, %s129
      %p143 = scmp.eq.s32.totalorder %s30, 1
      %p144 = por %p142, %p143
      %p146 = scmp.ne.s32.totalorder %s129, %s145
      %p147 = scmp.eq.s32.totalorder %s30, 0
      %p148 = por %p146, %p147
      %s149 = sld [smem:[#allocation3]]
      %s150 = sld [smem:[#allocation3]]
      %s151 = ssub.s32 %s149, %s150
      %p152 = scmp.eq.s32.totalorder %s151, 0
      %s154 = sadd.s32 %s153, 1
      %s155 = scalar_select %p152, %s153, %s154
      %p158 = pneg %p152
      %p159 = scmp.eq.s32.totalorder %s24, 1
      %p160 = por %p158, %p159
      %p161 = scmp.ne.s32.totalorder %s153, %s156
      %p162 = scmp.eq.s32.totalorder %s24, 0
      %p163 = por %p161, %p162
      %p164 = scmp.ne.s32.totalorder %s153, %s156
      %p165 = scmp.eq.s32.totalorder %s29, 1
      %p166 = por %p164, %p165
      %p167 = scmp.ne.s32.totalorder %s156, %s157
      %p168 = scmp.eq.s32.totalorder %s29, 0
      %p169 = por %p167, %p168
      %p170 = scmp.ne.s32.totalorder %s156, %s157
      %p171 = scmp.eq.s32.totalorder %s30, 1
      %p172 = por %p170, %p171
      %p174 = scmp.ne.s32.totalorder %s157, %s173
      %p175 = scmp.eq.s32.totalorder %s30, 0
      %p176 = por %p174, %p175
      %s177 = ssub.s32 %s24, %s31
      %p178 = scmp.eq.s32.totalorder %s177, 0
      %s180 = sadd.s32 %s179, 1
      %s181 = scalar_select %p178, %s179, %s180
      %p184 = pneg %p178
      %p185 = scmp.eq.s32.totalorder %s24, 1
      %p186 = por %p184, %p185
      %p187 = scmp.ne.s32.totalorder %s179, %s182
      %p188 = scmp.eq.s32.totalorder %s24, 0
      %p189 = por %p187, %p188
      %p190 = scmp.ne.s32.totalorder %s179, %s182
      %p191 = scmp.eq.s32.totalorder %s29, 1
      %p192 = por %p190, %p191
      %p193 = scmp.ne.s32.totalorder %s182, %s183
      %p194 = scmp.eq.s32.totalorder %s29, 0
      %p195 = por %p193, %p194
      %p196 = scmp.ne.s32.totalorder %s182, %s183
      %p197 = scmp.eq.s32.totalorder %s30, 1
      %p198 = por %p196, %p197
      %p200 = scmp.ne.s32.totalorder %s183, %s199
      %p201 = scmp.eq.s32.totalorder %s30, 0
      %p202 = por %p200, %p201
      %s203 = ssub.s32 %s24, %s31
      %p204 = scmp.eq.s32.totalorder %s203, 0
      %s206 = sadd.s32 %s205, 1
      %s207 = scalar_select %p204, %s205, %s206
      %p210 = pneg %p204
      %p211 = scmp.eq.s32.totalorder %s24, 1
      %p212 = por %p210, %p211
      %p213 = scmp.ne.s32.totalorder %s205, %s208
      %p214 = scmp.eq.s32.totalorder %s24, 0
      %p215 = por %p213, %p214
      %p216 = scmp.ne.s32.totalorder %s205, %s208
      %p217 = scmp.eq.s32.totalorder %s29, 1
      %p218 = por %p216, %p217
      %p219 = scmp.ne.s32.totalorder %s208, %s209
      %p220 = scmp.eq.s32.totalorder %s29, 0
      %p221 = por %p219, %p220
      %p222 = scmp.ne.s32.totalorder %s208, %s209
      %p223 = scmp.eq.s32.totalorder %s30, 1
      %p224 = por %p222, %p223
      %p226 = scmp.ne.s32.totalorder %s209, %s225
      %p227 = scmp.eq.s32.totalorder %s30, 0
      %p228 = por %p226, %p227
      %p229 = scmp.le.s32.totalorder 1, %s24
      %p230 = scmp.lt.s32.totalorder %s24, 3
      %p231 = pnand %p229, %p230
      %p232 = pneg %p231
      // Predicated region
      $region9: #{tpu_custom_call.1} parent=5 // pred_check
        _
      $region10: #{tpu_custom_call.1} parent=5 // pred_check_branch
        %234 = sbr.rel (%p231) target = $region12
      $region11: #{tpu_custom_call.1} parent=5 // pred_region
        %s235 = ssub.s32 %s24, 1
        // Predicated region
        $region13: #{tpu_custom_call.1} parent=11 // pred_check
          %p236 = pneg %p71
        $region14: #{tpu_custom_call.1} parent=11 // pred_check_branch
          %238 = sbr.rel (%p236) target = $region16
        $region15: #{tpu_custom_call.1} parent=11 // pred_region
          %240 = vsyncadd [#allocation8], 0
          %s241 = sshll.u32 %s2, 4
          %s242 = int_to_ptr.hbm [resolvable:$true] %s241
          %s243 = sshll.u32 [#allocation7], 4
          %s244 = int_to_ptr.vmem [resolvable:$true] %s243
          %249 = dma.hbm_to_vmem [thread:$0]  %s242, 128, %s244, [#allocation8], 64, 64, 4
        $region16: #{tpu_custom_call.1} parent=11 // pred_fallthru
          _
        // Predicated region
        $region17: #{tpu_custom_call.1} parent=11 // pred_check
          %p250 = pneg %p92
        $region18: #{tpu_custom_call.1} parent=11 // pred_check_branch
          %252 = sbr.rel (%p250) target = $region20
        $region19: #{tpu_custom_call.1} parent=11 // pred_region
          %254 = vsyncadd [#allocation8], 0
          %s256 = sshll.u32 %s3, 4
          %s257 = int_to_ptr.hbm [resolvable:$true] %s256
          %s258 = sshll.u32 [#allocation9], 4
          %s259 = int_to_ptr.vmem [resolvable:$true] %s258
          %261 = dma.hbm_to_vmem [thread:$0]  %s257, 16, %s259, [#allocation8]
        $region20: #{tpu_custom_call.1} parent=11 // pred_fallthru
          _
        // Predicated region
        $region21: #{tpu_custom_call.1} parent=11 // pred_check
          %p262 = pneg %p113
        $region22: #{tpu_custom_call.1} parent=11 // pred_check_branch
          %264 = sbr.rel (%p262) target = $region24
        $region23: #{tpu_custom_call.1} parent=11 // pred_region
          _
        $region24: #{tpu_custom_call.1} parent=11 // pred_fallthru
          _
        // Predicated region
        $region25: #{tpu_custom_call.1} parent=11 // pred_check
          %p265 = pneg %p141
        $region26: #{tpu_custom_call.1} parent=11 // pred_check_branch
          %267 = sbr.rel (%p265) target = $region28
        $region27: #{tpu_custom_call.1} parent=11 // pred_region
          %s268 = sld [smem:[#allocation3]]
          %270 = vsyncadd [#allocation11], 0
          %s271 = smul.addr %s268, 4
          %s272 = smul.addr %s271, 4
          %s273 = scalar_lea.hbm %s5, %s272
          %s274 = sshll.u32 %s273, 4
          %s275 = int_to_ptr.hbm [resolvable:$true] %s274
          %s276 = sshll.u32 [#allocation10], 4
          %s277 = int_to_ptr.vmem [resolvable:$true] %s276
          %282 = dma.hbm_to_vmem [thread:$0]  %s275, 256, %s277, [#allocation11], 64, 64, 4
        $region28: #{tpu_custom_call.1} parent=11 // pred_fallthru
          _
        // Predicated region
        $region29: #{tpu_custom_call.1} parent=11 // pred_check
          %p283 = pneg %p169
        $region30: #{tpu_custom_call.1} parent=11 // pred_check_branch
          %285 = sbr.rel (%p283) target = $region32
        $region31: #{tpu_custom_call.1} parent=11 // pred_region
          %s286 = sld [smem:[#allocation3]]
          %288 = vsyncadd [#allocation11], 0
          %s289 = scalar_lea.hbm %s6, %s286
          %s291 = sshll.u32 %s289, 4
          %s292 = int_to_ptr.hbm [resolvable:$true] %s291
          %s293 = sshll.u32 [#allocation12], 4
          %s294 = int_to_ptr.vmem [resolvable:$true] %s293
          %296 = dma.hbm_to_vmem [thread:$0]  %s292, 16, %s294, [#allocation11]
        $region32: #{tpu_custom_call.1} parent=11 // pred_fallthru
          _
      $region12: #{tpu_custom_call.1} parent=5 // pred_fallthru
        _
      %p297 = scmp.lt.s32.totalorder %s24, 2
      // Predicated region
      $region33: #{tpu_custom_call.1} parent=5 // pred_check
        %p298 = pneg %p297
      $region34: #{tpu_custom_call.1} parent=5 // pred_check_branch
        %300 = sbr.rel (%p298) target = $region36
      $region35: #{tpu_custom_call.1} parent=5 // pred_region
        // Predicated region
        $region37: #{tpu_custom_call.1} parent=35 // pred_check
          %p301 = pneg %p44
        $region38: #{tpu_custom_call.1} parent=35 // pred_check_branch
          %303 = sbr.rel (%p301) target = $region40
        $region39: #{tpu_custom_call.1} parent=35 // pred_region
          %s304 = sand.u32 %s34, 1
          %s305 = scalar_lea.sflag [#allocation5], %s304
          %s306 = sand.u32 %s34, 1
          %s307 = smul.addr %s306, 8
          %s308 = scalar_lea.vmem [#allocation4], %s307
          %310 = vsyncadd %s305, 0
          %s311 = smul.addr %s24, 8
          %s312 = scalar_lea.hbm %s1, %s311
          %s314 = sshll.u32 %s312, 4
          %s315 = int_to_ptr.hbm [resolvable:$true] %s314
          %s316 = sshll.u32 %s308, 4
          %s317 = int_to_ptr.vmem [resolvable:$true] %s316
          %319 = dma.hbm_to_vmem [thread:$0]  %s315, 128, %s317, %s305
        $region40: #{tpu_custom_call.1} parent=35 // pred_fallthru
          _
      $region36: #{tpu_custom_call.1} parent=5 // pred_fallthru
        _
      %p320 = scmp.le.s32.totalorder 1, %s24
      %p321 = scmp.lt.s32.totalorder %s24, 3
      %p322 = pnand %p320, %p321
      %p323 = pneg %p322
      // Predicated region
      $region41: #{tpu_custom_call.1} parent=5 // pred_check
        _
      $region42: #{tpu_custom_call.1} parent=5 // pred_check_branch
        %325 = sbr.rel (%p322) target = $region44
      $region43: #{tpu_custom_call.1} parent=5 // pred_region
        %s326 = ssub.s32 %s24, 1
        %s327 = sand.u32 %s37, 1
        %s328 = scalar_lea.sflag [#allocation5], %s327
        %s329 = sand.u32 %s37, 1
        %s330 = smul.addr %s329, 8
        %s331 = scalar_lea.vmem [#allocation4], %s330
        // Predicated region
        $region45: #{tpu_custom_call.1} parent=43 // pred_check
          %p332 = pneg %p50
        $region46: #{tpu_custom_call.1} parent=43 // pred_check_branch
          %334 = sbr.rel (%p332) target = $region48
        $region47: #{tpu_custom_call.1} parent=43 // pred_region
          %336 = dma.done %s328, 128
        $region48: #{tpu_custom_call.1} parent=43 // pred_fallthru
          _
        // Predicated region
        $region49: #{tpu_custom_call.1} parent=43 // pred_check
          %p337 = pneg %p71
        $region50: #{tpu_custom_call.1} parent=43 // pred_check_branch
          %339 = sbr.rel (%p337) target = $region52
        $region51: #{tpu_custom_call.1} parent=43 // pred_region
          %341 = dma.done [#allocation8], 128
        $region52: #{tpu_custom_call.1} parent=43 // pred_fallthru
          _
        // Predicated region
        $region53: #{tpu_custom_call.1} parent=43 // pred_check
          %p342 = pneg %p92
        $region54: #{tpu_custom_call.1} parent=43 // pred_check_branch
          %344 = sbr.rel (%p342) target = $region56
        $region55: #{tpu_custom_call.1} parent=43 // pred_region
          %346 = dma.done [#allocation8], 16
        $region56: #{tpu_custom_call.1} parent=43 // pred_fallthru
          _
        // Predicated region
        $region57: #{tpu_custom_call.1} parent=43 // pred_check
          %p347 = pneg %p141
        $region58: #{tpu_custom_call.1} parent=43 // pred_check_branch
          %349 = sbr.rel (%p347) target = $region60
        $region59: #{tpu_custom_call.1} parent=43 // pred_region
          %351 = dma.done [#allocation11], 256
        $region60: #{tpu_custom_call.1} parent=43 // pred_fallthru
          _
        // Predicated region
        $region61: #{tpu_custom_call.1} parent=43 // pred_check
          %p352 = pneg %p169
        $region62: #{tpu_custom_call.1} parent=43 // pred_check_branch
          %354 = sbr.rel (%p352) target = $region64
        $region63: #{tpu_custom_call.1} parent=43 // pred_region
          %356 = dma.done [#allocation11], 16
        $region64: #{tpu_custom_call.1} parent=43 // pred_fallthru
          _
        %s357 = sand.u32 %s37, 1
        %s358 = scalar_lea.sflag [#allocation5], %s357
        %s359 = sand.u32 %s37, 1
        %s360 = smul.addr %s359, 8
        %s361 = scalar_lea.vmem [#allocation4], %s360
        %p362 = pneg %p50
        %p363 = pneg %p47
        %p364 = pneg %p71
        %p365 = pneg %p68
        %p366 = pneg %p92
        %p367 = pneg %p89
        %p368 = pneg %p113
        %p369 = pneg %p110
        %p370 = pneg %p141
        %p371 = pneg %p138
        %p372 = pneg %p169
        %p373 = pneg %p166
        %p374 = pneg %p195
        %p375 = pneg %p192
        %p376 = scmp.lt.s32.totalorder %s29, 1
        %s377 = scalar_select %p376, %s29, 1
        %s378 = smul.addr %s377, 8
        %s379 = scalar_lea.vmem %s7, %s378
        %p380 = pneg %p221
        %p381 = pneg %p218
        %s382 = sand.u32 %s208, 1
        %s383 = scalar_lea.sflag [#allocation6], %s382
        %s384 = sand.u32 %s208, 1
        %s385 = smul.addr %s384, 8
        %s386 = scalar_lea.vmem [#allocation13], %s385
        %s387 = sld [smem:[#allocation3]]
        %s388 = sld [smem:[#allocation3]]
        %p389 = scmp.lt.s32.totalorder %s29, 1
        %s390 = scalar_select %p389, %s29, 1
        %s391 = smul.addr %s390, 8
        %s392 = scalar_lea.vmem %s7, %s391
        %v394 = vld [vmem:[%s331] sm:$0xff]
        %395 = vrot.lane.b32.xlu0 %v394, 127
        %v396 = vpop.permute.xlu0 %395
        %397 = vrot.lane.b32.xlu0 %v394, 126
        %v398 = vpop.permute.xlu0 %397
        %399 = vrot.lane.b32.xlu0 %v394, 125
        %v400 = vpop.permute.xlu0 %399
        %401 = vrot.lane.b32.xlu0 %v394, 124
        %v402 = vpop.permute.xlu0 %401
        %403 = vrot.lane.b32.xlu0 %v394, 123
        %v404 = vpop.permute.xlu0 %403
        %v405 = vlaneseq
        %v406 = vand.u32 %v405, 127
        %407 = vset.pattern.permute.xlu0 0
        %408 = vperm.xlu0 %407, %v394
        %v409 = vpop.permute.xlu0 %408
        %410 = vset.pattern.permute.xlu0 0
        %411 = vperm.xlu0 %410, %v396
        %v412 = vpop.permute.xlu0 %411
        %413 = vset.pattern.permute.xlu0 0
        %414 = vperm.xlu0 %413, %v398
        %v415 = vpop.permute.xlu0 %414
        %416 = vset.pattern.permute.xlu0 0
        %417 = vperm.xlu0 %416, %v400
        %v418 = vpop.permute.xlu0 %417
        %419 = vset.pattern.permute.xlu0 0
        %420 = vperm.xlu0 %419, %v402
        %v421 = vpop.permute.xlu0 %420
        %422 = vset.pattern.permute.xlu0 0
        %423 = vperm.xlu0 %422, %v404
        %v424 = vpop.permute.xlu0 %423
        %vm425 = vcmp.eq.s32.totalorder %v406, %v409
        %vm426 = vcmp.eq.s32.totalorder %v406, %v412
        %vm427 = vcmp.eq.s32.totalorder %v406, %v415
        %vm428 = vcmp.eq.s32.totalorder %v406, %v418
        %vm429 = vcmp.eq.s32.totalorder %v406, %v421
        %vm430 = vcmp.eq.s32.totalorder %v406, %v424
        %v431 = vsel %vm425, 1, 0
        %v432 = vsel %vm426, 1, 0
        %v433 = vsel %vm427, 1, 0
        %v434 = vsel %vm428, 1, 0
        %v435 = vsel %vm429, 1, 0
        %v436 = vsel %vm430, 1, 0
        %v437 = vcvt.s32.f32 %v431
        %v438 = vcvt.s32.f32 %v432
        %v439 = vcvt.s32.f32 %v433
        %v440 = vcvt.s32.f32 %v434
        %v441 = vcvt.s32.f32 %v435
        %v442 = vcvt.s32.f32 %v436
        %v443 = vpack.c.bf16 %v438, %v437
        %v444 = vpack.c.bf16 %v440, %v439
        %v445 = vpack.c.bf16 %v442, %v441
        %v446 = vld [vmem:[#allocation7] sm:$0xf]
        %v447 = vld [vmem:[#allocation7 + $0x4] sm:$0xf]
        %v448 = vld [vmem:[#allocation9] sm:$0x1]
        %v450 = vperm.slane %v448, 0
        %v454 = vunpack.c.l.b16 %v446
        %v455 = vunpack.c.l.b16 %v447
        %v456 = vpack.c.b16 %v455, %v454
        %vm458 = vcmask 130048
        %v460 = vsel %vm458, %v443, 0
        %v463 = vsel %vm458, %v444, 0
        %v466 = vsel %vm458, %v445, 0
        %468 = vmatpush.bf16.msra.mxu0 0
        %469 = vmatpush.bf16.msra.mxu0 0
        %470 = vmatpush.bf16.msra.mxu0 0
        %471 = vmatpush.bf16.msra.mxu0 0
        %472 = vmatpush.bf16.msra.mxu0 0
        %473 = vmatpush.bf16.msra.mxu0 0
        %474 = vmatpush.bf16.msra.mxu0 0
        %475 = vmatpush.bf16.msra.mxu0 %v456
        %476 = vmatmul.bf16.gmra.mxu0 %v460
        %v477 = vpop.f32.mrf.mxu0
        %v478 = vadd.f32 %v450, %v477
        %v479 = vpop.f32.mrf.mxu0
        %v480 = vadd.f32 %v450, %v479
        %481 = vmatmul.bf16.gmra.mxu0 %v463
        %v482 = vpop.f32.mrf.mxu0
        %v483 = vadd.f32 %v450, %v482
        %v484 = vpop.f32.mrf.mxu0
        %v485 = vadd.f32 %v450, %v484
        %486 = vmatmul.bf16.gmra.mxu0 %v466
        %v487 = vpop.f32.mrf.mxu0
        %v488 = vadd.f32 %v450, %v487
        %v489 = vpop.f32.mrf.mxu0
        %v490 = vadd.f32 %v450, %v489
        %491 = vdwg.mxu0
        %v492 = vld [vmem:[%s4] sm:$0xf]
        %vm493 = vcmp.eq.s32.totalorder %v394, 0
        %v494 = vsel %vm493, 1, 0
        %v495 = vcvt.s32.f32 %v494
        %497 = vset.pattern.permute.xlu0 6
        %498 = vperm.xlu0 %497, %v495
        %v499 = vpop.permute.xlu0 %498
        %v501 = vperm.slane %v492, 0
        %v502 = vmul.f32 %v499, %v501
        %v503 = vadd.f32 %v502, 0.0
        %vm504 = vcmp.eq.s32.totalorder %v394, 1
        %v505 = vsel %vm504, 1, 0
        %v506 = vcvt.s32.f32 %v505
        %508 = vset.pattern.permute.xlu0 6
        %509 = vperm.xlu0 %508, %v506
        %v510 = vpop.permute.xlu0 %509
        %v512 = vperm.slane %v492, 1
        %v513 = vmul.f32 %v510, %v512
        %v514 = vadd.f32 %v503, %v513
        %vm515 = vcmp.eq.s32.totalorder %v394, 2
        %v516 = vsel %vm515, 1, 0
        %v517 = vcvt.s32.f32 %v516
        %519 = vset.pattern.permute.xlu0 6
        %520 = vperm.xlu0 %519, %v517
        %v521 = vpop.permute.xlu0 %520
        %v523 = vperm.slane %v492, 2
        %v524 = vmul.f32 %v521, %v523
        %v525 = vadd.f32 %v514, %v524
        %vm526 = vcmp.eq.s32.totalorder %v394, 3
        %v527 = vsel %vm526, 1, 0
        %v528 = vcvt.s32.f32 %v527
        %530 = vset.pattern.permute.xlu0 6
        %531 = vperm.xlu0 %530, %v528
        %v532 = vpop.permute.xlu0 %531
        %v534 = vperm.slane %v492, 3
        %v535 = vmul.f32 %v532, %v534
        %v536 = vadd.f32 %v525, %v535
        %v537 = vmul.f32 %v478, %v485
        %v538 = vmul.f32 %v537, %v536
        %vm539 = vcmask 261120
        %v540 = vsel %vm539, %v538, 0.0
        %541 = vadd.xlane.f32.xlu0 %v540
        %v542 = vpop.xlane.xlu0 %541
        %v543 = vrcp.pop 32.0
        %v544 = vmul.f32 32.0, %v543
        %v545 = vsub.f32 1.0, %v544
        %v546 = vmul.f32 %v543, %v545
        %v547 = vadd.f32 %v543, %v546
        %vm548 = vweird.f32 %v543
        %v549 = vsel %vm548, %v543, %v547
        %v550 = vmul.f32 %v542, %v549
        %v551 = vadd.f32 %v538, 0.0
        %552 = vset.pattern.permute.xlu0 7
        %553 = vperm.xlu0 %552, %v495
        %v554 = vpop.permute.xlu0 %553
        %v556 = vmul.f32 %v554, %v501
        %v557 = vadd.f32 %v556, 0.0
        %558 = vset.pattern.permute.xlu0 7
        %559 = vperm.xlu0 %558, %v506
        %v560 = vpop.permute.xlu0 %559
        %v562 = vmul.f32 %v560, %v512
        %v563 = vadd.f32 %v557, %v562
        %564 = vset.pattern.permute.xlu0 7
        %565 = vperm.xlu0 %564, %v517
        %v566 = vpop.permute.xlu0 %565
        %v568 = vmul.f32 %v566, %v523
        %v569 = vadd.f32 %v563, %v568
        %570 = vset.pattern.permute.xlu0 7
        %571 = vperm.xlu0 %570, %v528
        %v572 = vpop.permute.xlu0 %571
        %v574 = vmul.f32 %v572, %v534
        %v575 = vadd.f32 %v569, %v574
        %v576 = vmul.f32 %v480, %v488
        %v577 = vmul.f32 %v576, %v575
        %v578 = vsel %vm539, %v577, 0.0
        %579 = vadd.xlane.f32.xlu0 %v578
        %v580 = vpop.xlane.xlu0 %579
        %v581 = vmul.f32 %v580, %v549
        %v582 = vadd.f32 %v551, %v577
        %583 = vset.pattern.permute.xlu0 8
        %584 = vperm.xlu0 %583, %v495
        %v585 = vpop.permute.xlu0 %584
        %v587 = vmul.f32 %v585, %v501
        %v588 = vadd.f32 %v587, 0.0
        %589 = vset.pattern.permute.xlu0 8
        %590 = vperm.xlu0 %589, %v506
        %v591 = vpop.permute.xlu0 %590
        %v593 = vmul.f32 %v591, %v512
        %v594 = vadd.f32 %v588, %v593
        %595 = vset.pattern.permute.xlu0 8
        %596 = vperm.xlu0 %595, %v517
        %v597 = vpop.permute.xlu0 %596
        %v599 = vmul.f32 %v597, %v523
        %v600 = vadd.f32 %v594, %v599
        %601 = vset.pattern.permute.xlu0 8
        %602 = vperm.xlu0 %601, %v528
        %v603 = vpop.permute.xlu0 %602
        %v605 = vmul.f32 %v603, %v534
        %v606 = vadd.f32 %v600, %v605
        %v607 = vmul.f32 %v483, %v490
        %v608 = vmul.f32 %v607, %v606
        %v609 = vsel %vm539, %v608, 0.0
        %610 = vadd.xlane.f32.xlu0 %v609
        %v611 = vpop.xlane.xlu0 %610
        %v612 = vmul.f32 %v611, %v549
        %v613 = vadd.f32 %v582, %v608
        %vm614 = vcmask 7168
        %v615 = vsel %vm614, %v550, %v581
        %vm616 = vcmask 15360
        %v617 = vsel %vm616, %v615, %v612
        %vm618 = vcmask 23552
        %619 = vst.msk [vmem:[%s392] sm:$0xff] %vm618, %v617
        %v620 = vmul.f32 %v613, 0.33333334
        %v621 = vpack.c.bf16 %v620, %v620
        %v622 = vld [vmem:[#allocation10] sm:$0xf]
        %v623 = vld [vmem:[#allocation10 + $0x4] sm:$0xf]
        %v624 = vld [vmem:[#allocation10 + $0x8] sm:$0xf]
        %v625 = vld [vmem:[#allocation10 + $0xc] sm:$0xf]
        %v626 = vld [vmem:[#allocation12] sm:$0x1]
        %v628 = vperm.slane %v626, 0
        %v634 = vunpack.c.l.b16 %v622
        %v635 = vunpack.c.l.b16 %v623
        %v636 = vunpack.c.l.b16 %v624
        %v637 = vunpack.c.l.b16 %v625
        %v638 = vpack.c.b16 %v635, %v634
        %v639 = vpack.c.b16 %v637, %v636
        %v643 = vsel %vm539, %v621, 0
        %645 = vmatpush.bf16.msra.mxu0 0
        %646 = vmatpush.bf16.msra.mxu0 0
        %647 = vmatpush.bf16.msra.mxu0 0
        %648 = vmatpush.bf16.msra.mxu0 0
        %649 = vmatpush.bf16.msra.mxu0 0
        %650 = vmatpush.bf16.msra.mxu0 0
        %651 = vmatpush.bf16.msra.mxu0 %v639
        %652 = vmatpush.bf16.msra.mxu0 %v638
        %653 = vmatmul.bf16.gmra.mxu0 %v643
        %v654 = vpop.f32.mrf.mxu0
        %v655 = vadd.f32 %v628, %v654
        %v656 = vpop.f32.mrf.mxu0
        %657 = vdwg.mxu0
        %658 = vst.msk [vmem:[%s386] sm:$0xff] %vm539, %v655
        %p659 = scmp.lt.s32.totalorder %s29, 1
        %s660 = scalar_select %p659, %s29, 1
        %s661 = smul.addr %s660, 8
        %s662 = scalar_lea.vmem %s7, %s661
        %s663 = sand.u32 %s208, 1
        %s664 = scalar_lea.sflag [#allocation6], %s663
        %s665 = sand.u32 %s208, 1
        %s666 = smul.addr %s665, 8
        %s667 = scalar_lea.vmem [#allocation13], %s666
        // Predicated region
        $region65: #{tpu_custom_call.1} parent=43 // pred_check
          %p668 = pneg %p192
        $region66: #{tpu_custom_call.1} parent=43 // pred_check_branch
          %670 = sbr.rel (%p668) target = $region68
        $region67: #{tpu_custom_call.1} parent=43 // pred_region
          _
        $region68: #{tpu_custom_call.1} parent=43 // pred_fallthru
          _
        // Predicated region
        $region69: #{tpu_custom_call.1} parent=43 // pred_check
          %p671 = pneg %p218
        $region70: #{tpu_custom_call.1} parent=43 // pred_check_branch
          %673 = sbr.rel (%p671) target = $region72
        $region71: #{tpu_custom_call.1} parent=43 // pred_region
          %675 = vsyncadd %s664, 0
          %s676 = smul.addr %s29, 8
          %s677 = scalar_lea.hbm %s8, %s676
          %s679 = sshll.u32 %s667, 4
          %s680 = int_to_ptr.vmem [resolvable:$true] %s679
          %s681 = sshll.u32 %s677, 4
          %s682 = int_to_ptr.hbm [resolvable:$true] %s681
          %684 = dma.vmem_to_hbm [thread:$0]  %s680, 128, %s682, %s664
        $region72: #{tpu_custom_call.1} parent=43 // pred_fallthru
          _
      $region44: #{tpu_custom_call.1} parent=5 // pred_fallthru
        _
      %p685 = scmp.le.s32.totalorder 2, %s24
      // Predicated region
      $region73: #{tpu_custom_call.1} parent=5 // pred_check
        %p686 = pneg %p685
      $region74: #{tpu_custom_call.1} parent=5 // pred_check_branch
        %688 = sbr.rel (%p686) target = $region76
      $region75: #{tpu_custom_call.1} parent=5 // pred_region
        %s689 = ssub.s32 %s24, 2
        // Predicated region
        $region77: #{tpu_custom_call.1} parent=75 // pred_check
          %p690 = pneg %p198
        $region78: #{tpu_custom_call.1} parent=75 // pred_check_branch
          %692 = sbr.rel (%p690) target = $region80
        $region79: #{tpu_custom_call.1} parent=75 // pred_region
          %p693 = scmp.lt.s32.totalorder %s30, 1
          %s694 = scalar_select %p693, %s30, 1
          %s695 = smul.addr %s694, 8
          %s696 = scalar_lea.vmem %s7, %s695
        $region80: #{tpu_custom_call.1} parent=75 // pred_fallthru
          _
        // Predicated region
        $region81: #{tpu_custom_call.1} parent=75 // pred_check
          %p697 = pneg %p224
        $region82: #{tpu_custom_call.1} parent=75 // pred_check_branch
          %699 = sbr.rel (%p697) target = $region84
        $region83: #{tpu_custom_call.1} parent=75 // pred_region
          %s700 = sand.u32 %s209, 1
          %s701 = scalar_lea.sflag [#allocation6], %s700
          %s702 = sand.u32 %s209, 1
          %s703 = smul.addr %s702, 8
          %s704 = scalar_lea.vmem [#allocation13], %s703
          %706 = dma.done %s701, 128
        $region84: #{tpu_custom_call.1} parent=75 // pred_fallthru
          _
      $region76: #{tpu_custom_call.1} parent=5 // pred_fallthru
        _
    $region6: #{tpu_custom_call.1} parent=1 // loop_footer
      %s28 = sadd.s32 1, %s24
    $region7: #{tpu_custom_call.1} parent=1 // loop_footer_branch
      %23 = sbr.rel target = $region3
    $region8: #{tpu_custom_call.1} parent=1 // loop_exit
      _
    %707 = vsyncpa [#allocation5], 1
    %s708 = scalar_lea.sflag [#allocation5], 1
    %709 = vsyncpa %s708, 1
    %710 = vsyncpa [#allocation8], 1
    %711 = vsyncpa [#allocation11], 1
    %712 = vsyncpa [#allocation6], 1
    %s713 = scalar_lea.sflag [#allocation6], 1
    %714 = vsyncpa %s713, 1

</llo_original>
